<compile_context>
chip_gen: v7x
topology: tpu7x:2x2x1
jax: 0.10.0
libtpu: 0.0.40
codegen_flags: <defaults>
</compile_context>

<pallas_src>
import jax
import jax.numpy as jnp
from jax.experimental import pallas as pl
from jax.experimental.pallas import tpu as pltpu


def _linear_on_ones_kernel(w_ref, o_ref):
    # w_ref: (1, 1) f32 Linear weight in SMEM (out_features=1, in_features=1)
    # o_ref: (1, 1) f32 output in SMEM.
    # out[0, 0] = sum_i ones[0, i] * W[0, i] == W[0, 0]  ->  a scalar copy.
    o_ref[0, 0] = w_ref[0, 0]


def dummy_model_forward(X, weight):
    """Pallas equivalent of DummyModel.forward.

    X is accepted for API parity with the PyTorch module but is unused,
    exactly as in the reference forward pass.
    """
    del X  # forward ignores its input
    out = pl.pallas_call(
        _linear_on_ones_kernel,
        out_shape=jax.ShapeDtypeStruct((1, 1), jnp.float32),
        # Scalar data -> scalar memory: whole (1,1) array in SMEM, no tiling.
        in_specs=[pl.BlockSpec(memory_space=pltpu.MemorySpace.SMEM)],
        out_specs=pl.BlockSpec(memory_space=pltpu.MemorySpace.SMEM),
        # Advisory: this call is ~free; don't serialize surrounding ops on it.
        cost_estimate=pl.CostEstimate(flops=1, transcendentals=0, bytes_accessed=8),
    )(weight)
    return out


if __name__ == "__main__":
    key = jax.random.PRNGKey(0)
    k_w, k_x = jax.random.split(key)

    # Deterministic parameter init matching torch.nn.Linear(1, 1, bias=False):
    # weight shape is (out_features=1, in_features=1).
    weight = jax.random.uniform(
        k_w, (1, 1), dtype=jnp.float32, minval=-1.0, maxval=1.0
    )

    # X is ignored by the forward pass; give it a small arbitrary shape.
    X = jax.random.normal(k_x, (2, 4), dtype=jnp.float32)

    # Reference: Linear(ones) with no bias -> ones @ W^T == W for 1x1.
    expected = jnp.ones((1, 1), jnp.float32) @ weight.T
    expected = jax.block_until_ready(expected)

    out = dummy_model_forward(X, weight)
    out = jax.block_until_ready(out)

    assert out.shape == (1, 1) and out.dtype == jnp.float32
    assert jnp.allclose(out, expected), (out, expected)

    print("KERNEL_OK")
</pallas_src>

<mosaic_0001>
module attributes {stable_mosaic.version = 11 : i64} {
  func.func @_linear_on_ones_kernel(%arg0: memref<1x1xf32, #tpu.memory_space<smem>>, %arg1: memref<1x1xf32, #tpu.memory_space<smem>>) attributes {dimension_semantics = [], scalar_prefetch = 0 : i64, scratch_operands = 0 : i64, tpu.core_type = #tpu.core_type<tc>} {
    %c0 = arith.constant 0 : index
    %c0_0 = arith.constant 0 : index
    %0 = memref.load %arg0[%c0, %c0_0] : memref<1x1xf32, #tpu.memory_space<smem>>
    %c0_1 = arith.constant 0 : index
    %c0_2 = arith.constant 0 : index
    %1 = memref.load %arg1[%c0_1, %c0_2] : memref<1x1xf32, #tpu.memory_space<smem>>
    memref.store %0, %arg1[%c0_1, %c0_2] : memref<1x1xf32, #tpu.memory_space<smem>>
    return
  }
}

</mosaic_0001>

<llo_original>
// kernel: tpu_custom_call.1
$region0: #{tpu_custom_call.1}
  #allocation0 [shape = 'u32[]', space=smem, size = 0x4, offset = 0x4, fixed_abs, tag = 'smem constant byte address 0x4 - core index']
  #allocation1 [shape = 'u32[144,128]{1,0:T(1,128)}', space=vmem, size = 0x12000, scoped, tag = 'internal scratch']
  #allocation2 [shape = 'f32[1,1]{1,0:T(1,128)S(6)}', space=smem, size = 0x200, scoped, tag = 'scoped memory for tpu_custom_call.1']
  %s0 = inlined_call_operand.<no memory space> [shape: f32[1,1], index: 0, kind: input, shape index: {}]
  %s1 = inlined_call_operand.hbm [shape: f32[1,1], index: 1, kind: output, shape index: {}]
  %s2 = sld [smem:[#allocation0]]
  $region14: #{tpu_custom_call.1} parent=0
    _
  %s4 = ssub.s32 1, %s2
  %s5 = scalar_select 0, %s4, %s2
  %6 = sst [smem:[#allocation2]] %s0
  $region1: #{tpu_custom_call.1} parent=0
    #allocation3 [shape = 'u8[512]{0}', space=smem, size = 0x200, scoped, tag = 'output window, operand 0, single buffered']
    #allocation4 [shape = 's32[1]{0}', space=sflag, size = 0x4, scoped, tag = 'scoped memory for tpu_custom_call.1']
    %7 = vsyncpa [#allocation4], 0
    // Predicated region
    $region2: #{tpu_custom_call.1} parent=1 // pred_check
      _
    $region3: #{tpu_custom_call.1} parent=1 // pred_check_branch
      %9 = sbr.rel (0) target = $region5
    $region4: #{tpu_custom_call.1} parent=1 // pred_region
      _
    $region5: #{tpu_custom_call.1} parent=1 // pred_fallthru
      _
    %s10 = sld [smem:[#allocation2]]
    %s11 = scalar_lea.smem [#allocation3], 0
    %12 = sst [smem:[%s11]] %s10
    // Predicated region
    $region6: #{tpu_custom_call.1} parent=1 // pred_check
      _
    $region7: #{tpu_custom_call.1} parent=1 // pred_check_branch
      %14 = sbr.rel (0) target = $region9
    $region8: #{tpu_custom_call.1} parent=1 // pred_region
      %s16 = ssub.s32 16, 16
      %17 = vsyncadd [#allocation4], %s16
      %20 = dma.smem_to_hbm [#allocation3], 16, %s1, [#allocation4]
    $region9: #{tpu_custom_call.1} parent=1 // pred_fallthru
      _
    // Predicated region
    $region10: #{tpu_custom_call.1} parent=1 // pred_check
      _
    $region11: #{tpu_custom_call.1} parent=1 // pred_check_branch
      %22 = sbr.rel (0) target = $region13
    $region12: #{tpu_custom_call.1} parent=1 // pred_region
      %23 = dma.done [#allocation4], 16
    $region13: #{tpu_custom_call.1} parent=1 // pred_fallthru
      _
    %24 = sfence
    %25 = vsyncpa [#allocation4], 1

</llo_original>
